<compile_context>
chip_gen: v6e
topology: v6e:2x2x1
jax: 0.10.0
libtpu: 0.0.40
codegen_flags: <defaults>
</compile_context>

<pallas_src>
import functools

import jax
import jax.numpy as jnp
from jax.experimental import pallas as pl
from jax.experimental.pallas import tpu as pltpu

DTYPE = jnp.bfloat16          # storage dtype for weights / activations
NEG_INF = -1e30               # additive mask value (f32 score domain)
EPS = 1e-5                    # matches RMSNorm(eps=1e-05) in the reference
TOKEN_TILE = 128              # base row tile for the token axis


# ----------------------------------------------------------------------------
# small helpers
# ----------------------------------------------------------------------------

@functools.lru_cache(maxsize=None)
def _vmem_limit_bytes():
    """Generation-aware VMEM budget: most of the chip, with headroom."""
    cap = 0
    try:
        info = pltpu.get_tpu_info()
        for name in ("vmem_capacity_bytes", "vmem_bytes", "vmem_size_bytes"):
            v = getattr(info, name, None)
            if isinstance(v, int) and v > 0:
                cap = v
                break
    except Exception:
        cap = 0
    if cap <= 0:
        cap = 128 * 1024 * 1024
    # leave ~16 MiB for compiler scratch/semaphores; never request > 100 MiB
    return int(min(max(cap - 16 * 1024 * 1024, 32 * 1024 * 1024),
                   100 * 1024 * 1024))


def _cparams(dims):
    return pltpu.CompilerParams(dimension_semantics=dims,
                                vmem_limit_bytes=_vmem_limit_bytes())


def _round_up(x, m):
    return (x + m - 1) // m * m


def _row_tile(m, pref):
    """Largest multiple of TOKEN_TILE that divides m and is <= pref."""
    t = max(min(pref, m) // TOKEN_TILE * TOKEN_TILE, TOKEN_TILE)
    while m % t:
        t -= TOKEN_TILE
    return t


def _col_tile(n, pref=512):
    """Lane-axis tile: a multiple of 128 dividing n, else the full dim."""
    if n % 128 != 0 or n <= pref:
        return n
    t = pref - (pref % 128)
    while n % t != 0:
        t -= 128
    return t


def _heads_per_step(num_heads, head_dim):
    """Smallest head group with a legal lane width (multiple of 128, or == D)."""
    for hg in range(1, num_heads):
        if num_heads % hg == 0 and (hg * head_dim) % 128 == 0:
            return hg
    return num_heads                      # full-width fallback (hw == D)


# ----------------------------------------------------------------------------
# Pallas kernels
# ----------------------------------------------------------------------------

def _patch_lnpre_kernel(x_ref, w_ref, nw_ref, o_ref, *, eps):
    # patch projection (im2col matmul) with ln_pre RMSNorm fused in the epilogue
    acc = jnp.dot(x_ref[...], w_ref[...], preferred_element_type=jnp.float32)
    inv = jax.lax.rsqrt(jnp.mean(acc * acc, axis=-1, keepdims=True) + eps)
    o_ref[...] = (acc * inv * nw_ref[...].astype(jnp.float32)).astype(o_ref.dtype)


def pallas_patch_embed_lnpre(patches, w, norm_w, eps=EPS, tm=256):
    M, K = patches.shape
    D = w.shape[1]
    tm = _row_tile(M, tm)
    return pl.pallas_call(
        functools.partial(_patch_lnpre_kernel, eps=eps),
        out_shape=jax.ShapeDtypeStruct((M, D), DTYPE),
        grid=(M // tm,),
        in_specs=[pl.BlockSpec((tm, K), lambda i: (i, 0)),
                  pl.BlockSpec((K, D), lambda i: (0, 0)),     # constant block ->
                  pl.BlockSpec((1, D), lambda i: (0, 0))],    # weight DMA'd once
        out_specs=pl.BlockSpec((tm, D), lambda i: (i, 0)),
        compiler_params=_cparams(("parallel",)),
    )(patches, w, norm_w.reshape(1, D))


def _matmul_res_kernel(x_ref, w_ref, r_ref, o_ref):
    acc = jnp.dot(x_ref[...], w_ref[...], preferred_element_type=jnp.float32)
    o_ref[...] = (acc + r_ref[...].astype(jnp.float32)).astype(o_ref.dtype)


def pallas_matmul_residual(x, w, res, tm=256):
    """res + x @ w (wo projection + residual). Weight block constant -> one DMA."""
    M, K = x.shape
    N = w.shape[1]
    tm = _row_tile(M, tm)
    return pl.pallas_call(
        _matmul_res_kernel,
        out_shape=jax.ShapeDtypeStruct((M, N), x.dtype),
        grid=(M // tm,),
        in_specs=[pl.BlockSpec((tm, K), lambda i: (i, 0)),
                  pl.BlockSpec((K, N), lambda i: (0, 0)),
                  pl.BlockSpec((tm, N), lambda i: (i, 0))],
        out_specs=pl.BlockSpec((tm, N), lambda i: (i, 0)),
        compiler_params=_cparams(("parallel",)),
    )(x, w, res)


def _norm_qkv_rope_kernel(x_ref, nw_ref, w_ref, cos_ref, sin_ref,
                          q_ref, k_ref, v_ref, *,
                          eps, num_heads, head_dim, scale):
    # fused attention_norm + one (D, 3D) QKV matmul + RoPE (and score scale)
    hd2 = head_dim // 2
    D = num_heads * head_dim

    x = x_ref[...].astype(jnp.float32)
    inv = jax.lax.rsqrt(jnp.mean(x * x, axis=-1, keepdims=True) + eps)
    xn = (x * inv * nw_ref[...].astype(jnp.float32)).astype(x_ref.dtype)

    qkv = jnp.dot(xn, w_ref[...], preferred_element_type=jnp.float32)  # (tm, 3D)
    cos = cos_ref[...]                                                 # (tm, hd/2)
    sin = sin_ref[...]

    def rope(slab):
        # q/k live per-head as [even | odd] halves (weight columns permuted
        # offline), so RoPE is a plain half-split complex multiply per head.
        halves = []
        for h in range(num_heads):
            lo = h * head_dim
            e = slab[:, lo:lo + hd2]
            o = slab[:, lo + hd2:lo + head_dim]
            halves.append(e * cos - o * sin)
            halves.append(e * sin + o * cos)
        return jnp.concatenate(halves, axis=-1)

    q_ref[...] = (rope(qkv[:, :D]) * scale).astype(q_ref.dtype)  # scale folded in
    k_ref[...] = rope(qkv[:, D:2 * D]).astype(k_ref.dtype)
    v_ref[...] = qkv[:, 2 * D:].astype(v_ref.dtype)


def pallas_norm_qkv_rope(x, norm_w, w_qkv, cos, sin, *,
                         num_heads, head_dim, eps=EPS, tm=TOKEN_TILE):
    M, D = x.shape
    tm = _row_tile(M, tm)
    hd2 = head_dim // 2
    spec_tok = pl.BlockSpec((tm, D), lambda i: (i, 0))
    return pl.pallas_call(
        functools.partial(_norm_qkv_rope_kernel, eps=eps, num_heads=num_heads,
                          head_dim=head_dim, scale=1.0 / head_dim ** 0.5),
        out_shape=tuple(jax.ShapeDtypeStruct((M, D), x.dtype) for _ in range(3)),
        grid=(M // tm,),
        in_specs=[spec_tok,
                  pl.BlockSpec((1, D), lambda i: (0, 0)),
                  pl.BlockSpec((D, 3 * D), lambda i: (0, 0)),   # fused weight, one DMA
                  pl.BlockSpec((tm, hd2), lambda i: (i, 0)),
                  pl.BlockSpec((tm, hd2), lambda i: (i, 0))],
        out_specs=(spec_tok, spec_tok, spec_tok),
        compiler_params=_cparams(("parallel",)),
    )(x, norm_w.reshape(1, D), w_qkv, cos, sin)


def _flash_attn_kernel(kvs_ref, kvl_ref, q_ref, k_ref, v_ref, segq_ref, segk_ref,
                       o_ref, m_sc, l_sc, acc_sc, *, heads, head_dim):
    qi = pl.program_id(1)
    ki = pl.program_id(2)

    @pl.when(ki == 0)
    def _():
        m_sc[...] = jnp.full_like(m_sc, -jnp.inf)
        l_sc[...] = jnp.zeros_like(l_sc)
        acc_sc[...] = jnp.zeros_like(acc_sc)

    # Only the kv tiles overlapping this q tile's image segments do any work;
    # out-of-range grid steps also skip the DMA (index_map is clamped).
    @pl.when(ki < kvl_ref[qi])
    def _():
        # Block-diagonal (per-image) mask from segment ids; pad tokens have
        # id -1 and therefore only attend other pad tokens.
        mask = segq_ref[...] == segk_ref[...]          # (tq, 1)==(1, tk) -> (tq, tk)

        for h in range(heads):
            lo = h * head_dim
            hi = lo + head_dim
            qh = q_ref[:, lo:hi]                       # roped + pre-scaled, bf16
            kh = k_ref[:, lo:hi]
            vh = v_ref[:, lo:hi]

            s = jnp.dot(qh, kh.T, preferred_element_type=jnp.float32)
            s = jnp.where(mask, s, NEG_INF)

            m_prev = m_sc[h]                           # (tq, 1)
            m_new = jnp.maximum(m_prev, jnp.max(s, axis=-1, keepdims=True))
            alpha = jnp.exp(m_prev - m_new)
            # second where is required: rows fully masked in this tile would
            # otherwise get exp(s - m_new) == 1 for masked entries.
            p = jnp.where(mask, jnp.exp(s - m_new), 0.0)
            l_sc[h] = alpha * l_sc[h] + jnp.sum(p, axis=-1, keepdims=True)
            acc_sc[:, lo:hi] = alpha * acc_sc[:, lo:hi] + jnp.dot(
                p.astype(vh.dtype), vh, preferred_element_type=jnp.float32)
            m_sc[h] = m_new

    @pl.when(ki == pl.num_programs(2) - 1)
    def _():
        tq = acc_sc.shape[0]
        # exact reciprocal: runs once per q tile, keeps parity with reference
        scale = jnp.concatenate(
            [jnp.broadcast_to(pl.reciprocal(l_sc[h], approx=False),
                              (tq, head_dim)) for h in range(heads)], axis=-1)
        o_ref[...] = (acc_sc[...] * scale).astype(o_ref.dtype)   # lane-dense store


def pallas_flash_attention(q, k, v, seg_row, seg_col, kv_start, kv_len, max_kv, *,
                           num_heads, head_dim, tq=256, tk=TOKEN_TILE):
    """q, k, v, out: (N_pad, D) with heads along columns; flash over kv tiles,
    restricted per q tile to the kv range of its image segments."""
    M, D = q.shape
    tq = _row_tile(M, tq)
    hg = _heads_per_step(num_heads, head_dim)
    n_hg = num_heads // hg
    hw = hg * head_dim

    def kv_index(h, qi, ki, kvs, kvl):
        # clamp -> off-range steps re-use the resident block (no re-DMA)
        return (kvs[qi] + jnp.minimum(ki, kvl[qi] - 1), h)

    def segk_index(h, qi, ki, kvs, kvl):
        return (0, kvs[qi] + jnp.minimum(ki, kvl[qi] - 1))

    grid_spec = pltpu.PrefetchScalarGridSpec(
        num_scalar_prefetch=2,
        grid=(n_hg, M // tq, max_kv),
        in_specs=[pl.BlockSpec((tq, hw), lambda h, qi, ki, kvs, kvl: (qi, h)),
                  pl.BlockSpec((tk, hw), kv_index),
                  pl.BlockSpec((tk, hw), kv_index),
                  pl.BlockSpec((tq, 1), lambda h, qi, ki, kvs, kvl: (qi, 0)),
                  pl.BlockSpec((1, tk), segk_index)],
        out_specs=pl.BlockSpec((tq, hw), lambda h, qi, ki, kvs, kvl: (qi, h)),
        scratch_shapes=[pltpu.VMEM((hg, tq, 1), jnp.float32),    # m
                        pltpu.VMEM((hg, tq, 1), jnp.float32),    # l
                        pltpu.VMEM((tq, hw), jnp.float32)])      # lane-dense acc

    return pl.pallas_call(
        functools.partial(_flash_attn_kernel, heads=hg, head_dim=head_dim),
        out_shape=jax.ShapeDtypeStruct((M, D), q.dtype),
        grid_spec=grid_spec,
        compiler_params=_cparams(("parallel", "parallel", "arbitrary")),
    )(kv_start, kv_len, q, k, v, seg_row, seg_col)


def _ffn_kernel(x_ref, nw_ref, w1_ref, w3_ref, w2_ref, o_ref,
                xn_ref, acc_ref, *, eps):
    # fused ffn_norm + SwiGLU + residual, tiled/accumulated over intermediate dim
    ii = pl.program_id(1)

    @pl.when(ii == 0)
    def _():
        x = x_ref[...].astype(jnp.float32)
        inv = jax.lax.rsqrt(jnp.mean(x * x, axis=-1, keepdims=True) + eps)
        xn_ref[...] = (x * inv * nw_ref[...].astype(jnp.float32)).astype(xn_ref.dtype)
        acc_ref[...] = jnp.zeros_like(acc_ref)

    xn = xn_ref[...]
    h1 = jnp.dot(xn, w1_ref[...], preferred_element_type=jnp.float32)
    h3 = jnp.dot(xn, w3_ref[...], preferred_element_type=jnp.float32)
    g = h1 * jax.nn.sigmoid(h1)                      # SiLU, f32
    acc_ref[...] += jnp.dot((g * h3).astype(xn.dtype), w2_ref[...],
                            preferred_element_type=jnp.float32)

    @pl.when(ii == pl.num_programs(1) - 1)
    def _():
        o_ref[...] = (acc_ref[...] + x_ref[...].astype(jnp.float32)).astype(o_ref.dtype)


def pallas_ffn(x, norm_w, w1, w3, w2, eps=EPS, tm=512, ti_pref=512):
    """Large token tile (pref 512) so w1/w3/w2 are re-streamed far less often."""
    M, D = x.shape
    I = w1.shape[1]
    tm = _row_tile(M, tm)
    ti = _col_tile(I, ti_pref)
    return pl.pallas_call(
        functools.partial(_ffn_kernel, eps=eps),
        out_shape=jax.ShapeDtypeStruct((M, D), x.dtype),
        grid=(M // tm, I // ti),
        in_specs=[pl.BlockSpec((tm, D), lambda i, j: (i, 0)),
                  pl.BlockSpec((1, D), lambda i, j: (0, 0)),
                  pl.BlockSpec((D, ti), lambda i, j: (0, j)),
                  pl.BlockSpec((D, ti), lambda i, j: (0, j)),
                  pl.BlockSpec((ti, D), lambda i, j: (j, 0))],
        out_specs=pl.BlockSpec((tm, D), lambda i, j: (i, 0)),
        scratch_shapes=[pltpu.VMEM((tm, D), x.dtype),       # normed activation
                        pltpu.VMEM((tm, D), jnp.float32)],  # f32 accumulator
        compiler_params=_cparams(("parallel", "arbitrary")),
    )(x, norm_w.reshape(1, D), w1, w3, w2)


# ----------------------------------------------------------------------------
# JAX glue (im2col, RoPE tables, positions, segment/kv ranges, params)
# ----------------------------------------------------------------------------

def precompute_freqs_cos_sin_2d(dim, height, width, theta):
    """Real-valued (cos, sin) version of precompute_freqs_cis_2d."""
    freqs = 1.0 / theta ** (jnp.arange(0, dim, 2, dtype=jnp.float32) / dim)
    h = jnp.arange(height, dtype=jnp.float32)
    w = jnp.arange(width, dtype=jnp.float32)
    freqs_h = jnp.outer(h, freqs[::2])
    freqs_w = jnp.outer(w, freqs[1::2])
    fh = jnp.broadcast_to(freqs_h[:, None, :], (height, width, freqs_h.shape[-1]))
    fw = jnp.broadcast_to(freqs_w[None, :, :], (height, width, freqs_w.shape[-1]))
    f2d = jnp.concatenate([fh, fw], axis=-1)       # (H, W, dim/2)
    return jnp.cos(f2d), jnp.sin(f2d)


def position_meshgrid(grids):
    pos = []
    for Hp, Wp in grids:
        hh, ww = jnp.meshgrid(jnp.arange(Hp), jnp.arange(Wp), indexing="ij")
        pos.append(jnp.stack([hh, ww], axis=-1).reshape(-1, 2))
    return jnp.concatenate(pos, axis=0)


def im2col(img, p):
    """(C, H, W) -> (Hp*Wp, C*p*p) with (C, ph, pw) contraction order."""
    C, H, W = img.shape
    Hp, Wp = H // p, W // p
    x = img.reshape(C, Hp, p, Wp, p)
    x = x.transpose(1, 3, 0, 2, 4)                 # (Hp, Wp, C, p, p)
    return x.reshape(Hp * Wp, C * p * p)


def _deinterleave_perm(n_heads, head_dim):
    """Column permutation that stores each head as [even | odd] halves."""
    hd2 = head_dim // 2
    perm = []
    for h in range(n_heads):
        base = h * head_dim
        perm += [base + 2 * j for j in range(hd2)]
        perm += [base + 2 * j + 1 for j in range(hd2)]
    return jnp.array(perm, dtype=jnp.int32)


def _build_segments_and_kv_ranges(tokens_per_image, n_tok, n_pad, tq, tk):
    """Per-token segment ids and, per q tile, the contiguous kv tile range it needs."""
    seg_ids = []
    for i, t in enumerate(tokens_per_image):
        seg_ids += [i] * t
    seg_ids += [-1] * (n_pad - n_tok)

    bounds = {}
    start = 0
    for i, t in enumerate(tokens_per_image):
        bounds[i] = (start, start + t)
        start += t
    if n_pad > n_tok:
        bounds[-1] = (n_tok, n_pad)

    n_q = n_pad // tq
    kv_start, kv_len = [], []
    for qi in range(n_q):
        s0 = seg_ids[qi * tq]
        s1 = seg_ids[(qi + 1) * tq - 1]
        t0 = bounds[s0][0] // tk
        t1 = -(-bounds[s1][1] // tk)               # ceil div
        kv_start.append(t0)
        kv_len.append(t1 - t0)
    max_kv = max(kv_len)

    seg = jnp.asarray(seg_ids, dtype=jnp.int32)
    return (seg.reshape(n_pad, 1), seg.reshape(1, n_pad),
            jnp.asarray(kv_start, jnp.int32), jnp.asarray(kv_len, jnp.int32),
            max_kv)


def init_params(key, args):
    D = args["hidden_size"]
    C = args["num_channels"]
    P = args["patch_size"]
    I = args["intermediate_size"]
    L = args["num_hidden_layers"]
    nH = args["num_attention_heads"]
    hd = D // nH
    perm = _deinterleave_perm(nH, hd)

    def normal(k, shape):
        return (0.02 * jax.random.normal(k, shape, dtype=jnp.float32)).astype(DTYPE)

    keys = jax.random.split(key, 1 + 7 * L)
    params = {
        # conv weight stored pre-reshaped to (C*p*p, D) for the im2col matmul
        "patch_w": normal(keys[0], (C * P * P, D)),
        "ln_pre_w": jnp.ones((D,), DTYPE),
        "layers": [],
    }
    for l in range(L):
        k = keys[1 + 7 * l: 1 + 7 * (l + 1)]
        wq = normal(k[0], (D, D))
        wk = normal(k[1], (D, D))
        wv = normal(k[2], (D, D))
        params["layers"].append({
            "attn_norm_w": jnp.ones((D,), DTYPE),
            "ffn_norm_w": jnp.ones((D,), DTYPE),
            # fused QKV weight; RoPE de-interleave hoisted into wq/wk columns
            # (q.k^T is invariant to that permutation); v/wo stay in the
            # original basis -> wo stays correct.
            "w_qkv": jnp.concatenate([wq[:, perm], wk[:, perm], wv], axis=1),
            "wo": normal(k[3], (D, D)),
            "w1": normal(k[4], (D, I)),
            "w3": normal(k[5], (D, I)),
            "w2": normal(k[6], (I, D)),
        })
    return params


def vision_transformer_forward(images, params, args):
    D = args["hidden_size"]
    P = args["patch_size"]
    nH = args["num_attention_heads"]
    hd = D // nH
    max_pps = args["image_size"] // P

    # --- patch conv: per-image im2col merged into ONE padded matmul (+ln_pre) ---
    chunks, grids = [], []
    for img in images:
        C, H, W = img.shape
        Hp, Wp = H // P, W // P
        chunks.append(im2col(img.astype(jnp.float32), P))
        grids.append((Hp, Wp))
    patches = jnp.concatenate(chunks, axis=0)                    # (N_tok, C*p*p)
    n_tok = patches.shape[0]
    n_pad = _round_up(n_tok, TOKEN_TILE)
    patches = jnp.pad(patches, ((0, n_pad - n_tok), (0, 0))).astype(DTYPE)

    x = pallas_patch_embed_lnpre(patches, params["patch_w"], params["ln_pre_w"])

    # --- rotary tables gathered at patch positions (f32, row-padded) ---
    cos_tab, sin_tab = precompute_freqs_cos_sin_2d(
        hd, max_pps, max_pps, args["rope_theta"])
    positions = position_meshgrid(grids)
    cos = jnp.pad(cos_tab[positions[:, 0], positions[:, 1]],
                  ((0, n_pad - n_tok), (0, 0)))                  # (n_pad, hd/2)
    sin = jnp.pad(sin_tab[positions[:, 0], positions[:, 1]],
                  ((0, n_pad - n_tok), (0, 0)))

    # --- segment ids + per-q-tile kv ranges (block-diagonal mask exploitation) ---
    tq = _row_tile(n_pad, 256)
    tokens_per_image = [hp * wp for hp, wp in grids]
    seg_row, seg_col, kv_start, kv_len, max_kv = _build_segments_and_kv_ranges(
        tokens_per_image, n_tok, n_pad, tq, TOKEN_TILE)

    # --- transformer layers ---
    for lp in params["layers"]:
        q, k, v = pallas_norm_qkv_rope(x, lp["attn_norm_w"], lp["w_qkv"],
                                       cos, sin, num_heads=nH, head_dim=hd)
        attn = pallas_flash_attention(q, k, v, seg_row, seg_col,
                                      kv_start, kv_len, max_kv,
                                      num_heads=nH, head_dim=hd, tq=tq)
        x = pallas_matmul_residual(attn, lp["wo"], x)            # + residual
        x = pallas_ffn(x, lp["ffn_norm_w"], lp["w1"], lp["w3"], lp["w2"])

    return x[:n_tok].astype(jnp.float32)                         # (N_toks, D)


# ----------------------------------------------------------------------------
# main
# ----------------------------------------------------------------------------

if __name__ == "__main__":
    args = dict(
        hidden_size=64,
        num_channels=3,
        image_size=32,
        patch_size=8,
        intermediate_size=128,
        num_hidden_layers=2,
        num_attention_heads=4,
        rope_theta=10000.0,
        image_token_id=0,
    )

    key = jax.random.PRNGKey(0)
    kp, k1, k2 = jax.random.split(key, 3)
    params = init_params(kp, args)

    # Two variable-sized images (C, H, W), matching the PyTorch per-image API.
    img0 = jax.random.normal(k1, (3, 32, 32), dtype=jnp.float32)  # 4x4 = 16 patches
    img1 = jax.random.normal(k2, (3, 16, 24), dtype=jnp.float32)  # 2x3 = 6 patches
    images = [img0, img1]

    out = vision_transformer_forward(images, params, args)
    out = jax.block_until_ready(out)

    expected_tokens = 16 + 6
    assert out.shape == (expected_tokens, args["hidden_size"]), out.shape
    assert bool(jnp.all(jnp.isfinite(out)))
    print("KERNEL_OK")
</pallas_src>

<mosaic_0001>
module attributes {stable_mosaic.version = 11 : i64} {
  func.func @_patch_lnpre_kernel(%arg0: i32, %arg1: memref<128x192xbf16, #tpu.memory_space<vmem>>, %arg2: memref<192x64xbf16, #tpu.memory_space<vmem>>, %arg3: memref<1x64xbf16, #tpu.memory_space<vmem>>, %arg4: memref<128x64xbf16, #tpu.memory_space<vmem>>) attributes {dimension_semantics = [#tpu.dimension_semantics<parallel>], iteration_bounds = array<i64: 1>, scalar_prefetch = 0 : i64, scratch_operands = 0 : i64, tpu.core_type = #tpu.core_type<tc>, window_params = [{transform_indices = @transform_0, window_bounds = array<i64: 128, 192>}, {pipeline_mode = #tpu.pipeline_mode<synchronous>, transform_indices = @transform_1, window_bounds = array<i64: 192, 64>}, {pipeline_mode = #tpu.pipeline_mode<synchronous>, transform_indices = @transform_2, window_bounds = array<i64: 1, 64>}, {transform_indices = @transform_3, window_bounds = array<i64: 128, 64>}]} {
    %c0 = arith.constant 0 : index
    %c0_0 = arith.constant 0 : index
    %0 = vector.load %arg1[%c0, %c0_0] : memref<128x192xbf16, #tpu.memory_space<vmem>>, vector<128x192xbf16>
    %c0_1 = arith.constant 0 : index
    %c0_2 = arith.constant 0 : index
    %1 = vector.load %arg2[%c0_1, %c0_2] : memref<192x64xbf16, #tpu.memory_space<vmem>>, vector<192x64xbf16>
    %cst = arith.constant dense<0.000000e+00> : vector<128x64xf32>
    %2 = tpu.matmul %0, %1, %cst {dimension_numbers = #tpu.dot_dimension_numbers<[1], [0], [0], [1], [0, 0, 1, 1], [], []>} : vector<128x192xbf16>, vector<192x64xbf16>, vector<128x64xf32> -> vector<128x64xf32>
    %3 = arith.mulf %2, %2 : vector<128x64xf32>
    %cst_3 = arith.constant dense<0.000000e+00> : vector<128xf32>
    %4 = vector.multi_reduction <add>, %3, %cst_3 [1] : vector<128x64xf32> to vector<128xf32>
    %5 = vector.shape_cast %4 : vector<128xf32> to vector<128x1xf32>
    %cst_4 = arith.constant 6.400000e+01 : f32
    %6 = vector.broadcast %cst_4 : f32 to vector<128x1xf32>
    %7 = arith.divf %5, %6 : vector<128x1xf32>
    %cst_5 = arith.constant 9.99999974E-6 : f32
    %8 = vector.broadcast %cst_5 : f32 to vector<128x1xf32>
    %9 = arith.addf %7, %8 : vector<128x1xf32>
    %10 = math.rsqrt %9 : vector<128x1xf32>
    %11 = vector.broadcast %10 : vector<128x1xf32> to vector<128x64xf32>
    %12 = arith.mulf %2, %11 : vector<128x64xf32>
    %c0_6 = arith.constant 0 : index
    %c0_7 = arith.constant 0 : index
    %13 = vector.load %arg3[%c0_6, %c0_7] : memref<1x64xbf16, #tpu.memory_space<vmem>>, vector<1x64xbf16>
    %14 = arith.extf %13 : vector<1x64xbf16> to vector<1x64xf32>
    %15 = vector.broadcast %14 : vector<1x64xf32> to vector<128x64xf32>
    %16 = arith.mulf %12, %15 : vector<128x64xf32>
    %17 = arith.truncf %16 : vector<128x64xf32> to vector<128x64xbf16>
    %c0_8 = arith.constant 0 : index
    %c0_9 = arith.constant 0 : index
    %18 = vector.load %arg4[%c0_8, %c0_9] : memref<128x64xbf16, #tpu.memory_space<vmem>>, vector<128x64xbf16>
    tpu.vector_store %arg4[%c0_8, %c0_9], %17 {strides = array<i32>} : memref<128x64xbf16, #tpu.memory_space<vmem>>, vector<128x64xbf16>,
    return
  }
  func.func @transform_0(%arg0: i32) -> (i32, i32) {
    %c0_i32 = arith.constant 0 : i32
    %c0_i32_0 = arith.constant 0 : i32
    return %arg0, %c0_i32 : i32, i32
  }
  func.func @transform_1(%arg0: i32) -> (i32, i32) {
    %c0_i32 = arith.constant 0 : i32
    %c0_i32_0 = arith.constant 0 : i32
    %c0_i32_1 = arith.constant 0 : i32
    return %c0_i32, %c0_i32_0 : i32, i32
  }
  func.func @transform_2(%arg0: i32) -> (i32, i32) {
    %c0_i32 = arith.constant 0 : i32
    %c0_i32_0 = arith.constant 0 : i32
    %c0_i32_1 = arith.constant 0 : i32
    return %c0_i32, %c0_i32_0 : i32, i32
  }
  func.func @transform_3(%arg0: i32) -> (i32, i32) {
    %c0_i32 = arith.constant 0 : i32
    %c0_i32_0 = arith.constant 0 : i32
    return %arg0, %c0_i32 : i32, i32
  }
}

</mosaic_0001>

<llo_original>
// kernel: tpu_custom_call.1
$region0: #{tpu_custom_call.1}
  #allocation0 [shape = 'u32[]', space=smem, size = 0x4, offset = 0x4, fixed_abs, tag = 'smem constant byte address 0x4 - core index']
  #allocation1 [shape = 'u32[144,128]{1,0:T(1,128)}', space=vmem, size = 0x12000, scoped, tag = 'internal scratch']
  %s0 = inlined_call_operand.vmem [shape: bf16[128,192], index: 0, kind: input, shape index: {}]
  %s1 = inlined_call_operand.vmem [shape: bf16[192,64], index: 1, kind: input, shape index: {}]
  %s2 = inlined_call_operand.vmem [shape: bf16[1,64], index: 2, kind: input, shape index: {}]
  %s3 = inlined_call_operand.vmem [shape: bf16[128,64], index: 3, kind: output, shape index: {}]
  %s4 = sld [smem:[#allocation0]]
  $region22: #{tpu_custom_call.1} parent=0
    _
  %s6 = ssub.s32 1, %s4
  %s7 = scalar_select 0, %s6, %s4
  // Predicated region
  $region2: #{tpu_custom_call.1} parent=0 // pred_check
    _
  $region3: #{tpu_custom_call.1} parent=0 // pred_check_branch
    %9 = sbr.rel (0) target = $region5
  $region4: #{tpu_custom_call.1} parent=0 // pred_region
    _
  $region5: #{tpu_custom_call.1} parent=0 // pred_fallthru
    _
  // Predicated region
  $region6: #{tpu_custom_call.1} parent=0 // pred_check
    _
  $region7: #{tpu_custom_call.1} parent=0 // pred_check_branch
    %11 = sbr.rel (0) target = $region9
  $region8: #{tpu_custom_call.1} parent=0 // pred_region
    _
  $region9: #{tpu_custom_call.1} parent=0 // pred_fallthru
    _
  // Predicated region
  $region10: #{tpu_custom_call.1} parent=0 // pred_check
    _
  $region11: #{tpu_custom_call.1} parent=0 // pred_check_branch
    %13 = sbr.rel (0) target = $region13
  $region12: #{tpu_custom_call.1} parent=0 // pred_region
    _
  $region13: #{tpu_custom_call.1} parent=0 // pred_fallthru
    _
  %v15 = vld [vmem:[%s0] sm:$0xff]
  %v16 = vld [vmem:[%s0 + $0x8] sm:$0xff]
  %v17 = vld [vmem:[%s0 + $0x10] sm:$0xff]
  %v18 = vld [vmem:[%s0 + $0x18] sm:$0xff]
  %v19 = vld [vmem:[%s0 + $0x20] sm:$0xff]
  %v20 = vld [vmem:[%s0 + $0x28] sm:$0xff]
  %v21 = vld [vmem:[%s0 + $0x30] sm:$0xff]
  %v22 = vld [vmem:[%s0 + $0x38] sm:$0xff]
  %v23 = vld [vmem:[%s0 + $0x40] sm:$0xff]
  %v24 = vld [vmem:[%s0 + $0x48] sm:$0xff]
  %v25 = vld [vmem:[%s0 + $0x50] sm:$0xff]
  %v26 = vld [vmem:[%s0 + $0x58] sm:$0xff]
  %v27 = vld [vmem:[%s0 + $0x60] sm:$0xff]
  %v28 = vld [vmem:[%s0 + $0x68] sm:$0xff]
  %v29 = vld [vmem:[%s0 + $0x70] sm:$0xff]
  %v30 = vld [vmem:[%s0 + $0x78] sm:$0xff]
  %v31 = vld [vmem:[%s1] sm:$0xf]
  %v32 = vld [vmem:[%s1 + $0x4] sm:$0xf]
  %v33 = vld [vmem:[%s1 + $0x8] sm:$0xf]
  %v34 = vld [vmem:[%s1 + $0xc] sm:$0xf]
  %v35 = vld [vmem:[%s1 + $0x10] sm:$0xf]
  %v36 = vld [vmem:[%s1 + $0x14] sm:$0xf]
  %v37 = vld [vmem:[%s1 + $0x18] sm:$0xf]
  %v38 = vld [vmem:[%s1 + $0x1c] sm:$0xf]
  %v39 = vld [vmem:[%s1 + $0x20] sm:$0xf]
  %v40 = vld [vmem:[%s1 + $0x24] sm:$0xf]
  %v41 = vld [vmem:[%s1 + $0x28] sm:$0xf]
  %v42 = vld [vmem:[%s1 + $0x2c] sm:$0xf]
  %v43 = vld [vmem:[%s1 + $0x30] sm:$0xf]
  %v44 = vld [vmem:[%s1 + $0x34] sm:$0xf]
  %v45 = vld [vmem:[%s1 + $0x38] sm:$0xf]
  %v46 = vld [vmem:[%s1 + $0x3c] sm:$0xf]
  %v47 = vld [vmem:[%s1 + $0x40] sm:$0xf]
  %v48 = vld [vmem:[%s1 + $0x44] sm:$0xf]
  %v49 = vld [vmem:[%s1 + $0x48] sm:$0xf]
  %v50 = vld [vmem:[%s1 + $0x4c] sm:$0xf]
  %v51 = vld [vmem:[%s1 + $0x50] sm:$0xf]
  %v52 = vld [vmem:[%s1 + $0x54] sm:$0xf]
  %v53 = vld [vmem:[%s1 + $0x58] sm:$0xf]
  %v54 = vld [vmem:[%s1 + $0x5c] sm:$0xf]
  %v71 = vunpack.c.l.b16 %v15
  %v72 = vunpack.c.h.b16 %v15
  %v73 = vunpack.c.l.b16 %v16
  %v74 = vunpack.c.h.b16 %v16
  %v75 = vunpack.c.l.b16 %v17
  %v76 = vunpack.c.h.b16 %v17
  %v77 = vunpack.c.l.b16 %v18
  %v78 = vunpack.c.h.b16 %v18
  %v79 = vunpack.c.l.b16 %v19
  %v80 = vunpack.c.h.b16 %v19
  %v81 = vunpack.c.l.b16 %v20
  %v82 = vunpack.c.h.b16 %v20
  %v83 = vunpack.c.l.b16 %v21
  %v84 = vunpack.c.h.b16 %v21
  %v85 = vunpack.c.l.b16 %v22
  %v86 = vunpack.c.h.b16 %v22
  %v87 = vunpack.c.l.b16 %v23
  %v88 = vunpack.c.h.b16 %v23
  %v89 = vunpack.c.l.b16 %v24
  %v90 = vunpack.c.h.b16 %v24
  %v91 = vunpack.c.l.b16 %v25
  %v92 = vunpack.c.h.b16 %v25
  %v93 = vunpack.c.l.b16 %v26
  %v94 = vunpack.c.h.b16 %v26
  %v95 = vunpack.c.l.b16 %v27
  %v96 = vunpack.c.h.b16 %v27
  %v97 = vunpack.c.l.b16 %v28
  %v98 = vunpack.c.h.b16 %v28
  %v99 = vunpack.c.l.b16 %v29
  %v100 = vunpack.c.h.b16 %v29
  %v101 = vunpack.c.l.b16 %v30
  %v102 = vunpack.c.h.b16 %v30
  %v103 = vpack.c.b16 %v73, %v71
  %v104 = vpack.c.b16 %v74, %v72
  %v105 = vpack.c.b16 %v77, %v75
  %v106 = vpack.c.b16 %v78, %v76
  %v107 = vpack.c.b16 %v81, %v79
  %v108 = vpack.c.b16 %v82, %v80
  %v109 = vpack.c.b16 %v85, %v83
  %v110 = vpack.c.b16 %v86, %v84
  %v111 = vpack.c.b16 %v89, %v87
  %v112 = vpack.c.b16 %v90, %v88
  %v113 = vpack.c.b16 %v93, %v91
  %v114 = vpack.c.b16 %v94, %v92
  %v115 = vpack.c.b16 %v97, %v95
  %v116 = vpack.c.b16 %v98, %v96
  %v117 = vpack.c.b16 %v101, %v99
  %v118 = vpack.c.b16 %v102, %v100
  %v151 = vunpack.c.l.b16 %v31
  %v152 = vunpack.c.l.b16 %v32
  %v153 = vunpack.c.l.b16 %v33
  %v154 = vunpack.c.l.b16 %v34
  %v155 = vunpack.c.l.b16 %v35
  %v156 = vunpack.c.l.b16 %v36
  %v157 = vunpack.c.l.b16 %v37
  %v158 = vunpack.c.l.b16 %v38
  %v159 = vunpack.c.l.b16 %v39
  %v160 = vunpack.c.l.b16 %v40
  %v161 = vunpack.c.l.b16 %v41
  %v162 = vunpack.c.l.b16 %v42
  %v163 = vunpack.c.l.b16 %v43
  %v164 = vunpack.c.l.b16 %v44
  %v165 = vunpack.c.l.b16 %v45
  %v166 = vunpack.c.l.b16 %v46
  %v167 = vunpack.c.l.b16 %v47
  %v168 = vunpack.c.l.b16 %v48
  %v169 = vunpack.c.l.b16 %v49
  %v170 = vunpack.c.l.b16 %v50
  %v171 = vunpack.c.l.b16 %v51
  %v172 = vunpack.c.l.b16 %v52
  %v173 = vunpack.c.l.b16 %v53
  %v174 = vunpack.c.l.b16 %v54
  %v175 = vpack.c.b16 %v152, %v151
  %v176 = vpack.c.b16 %v154, %v153
  %v177 = vpack.c.b16 %v156, %v155
  %v178 = vpack.c.b16 %v158, %v157
  %v179 = vpack.c.b16 %v160, %v159
  %v180 = vpack.c.b16 %v162, %v161
  %v181 = vpack.c.b16 %v164, %v163
  %v182 = vpack.c.b16 %v166, %v165
  %v183 = vpack.c.b16 %v168, %v167
  %v184 = vpack.c.b16 %v170, %v169
  %v185 = vpack.c.b16 %v172, %v171
  %v186 = vpack.c.b16 %v174, %v173
  %vm199 = vcmask 523264
  %v201 = vsel %vm199, %v104, 0
  %v204 = vsel %vm199, %v106, 0
  %v207 = vsel %vm199, %v108, 0
  %v210 = vsel %vm199, %v110, 0
  %v213 = vsel %vm199, %v112, 0
  %v216 = vsel %vm199, %v114, 0
  %v219 = vsel %vm199, %v116, 0
  %v222 = vsel %vm199, %v118, 0
  %224 = vmatprep.subr.bf16.mxu0 0
  %225 = vmatpush1.bf16.msra.mxu0 %v182
  %226 = vmatprep.subr.bf16.mxu0 0
  %227 = vmatpush1.bf16.msra.mxu0 %v181
  %228 = vmatprep.subr.bf16.mxu0 0
  %229 = vmatpush1.bf16.msra.mxu0 %v180
  %230 = vmatprep.subr.bf16.mxu0 0
  %231 = vmatpush1.bf16.msra.mxu0 %v179
  %232 = vmatprep.subr.bf16.mxu0 0
  %233 = vmatpush1.bf16.msra.mxu0 %v178
  %234 = vmatprep.subr.bf16.mxu0 0
  %235 = vmatpush1.bf16.msra.mxu0 %v177
  %236 = vmatprep.subr.bf16.mxu0 0
  %237 = vmatpush1.bf16.msra.mxu0 %v176
  %238 = vmatprep.subr.bf16.mxu0 0
  %239 = vmatpush1.bf16.msra.mxu0 %v175
  %240 = vmatprep.subr.bf16.mxu0 0
  %241 = vmatpush2.bf16.msra.mxu0 0
  %242 = vmatprep.subr.bf16.mxu0 0
  %243 = vmatpush2.bf16.msra.mxu0 0
  %244 = vmatprep.subr.bf16.mxu0 0
  %245 = vmatpush2.bf16.msra.mxu0 0
  %246 = vmatprep.subr.bf16.mxu0 0
  %247 = vmatpush2.bf16.msra.mxu0 0
  %248 = vmatprep.subr.bf16.mxu0 0
  %249 = vmatpush2.bf16.msra.mxu0 %v186
  %250 = vmatprep.subr.bf16.mxu0 0
  %251 = vmatpush2.bf16.msra.mxu0 %v185
  %252 = vmatprep.subr.bf16.mxu0 0
  %253 = vmatpush2.bf16.msra.mxu0 %v184
  %254 = vmatprep.subr.bf16.mxu0 0
  %255 = vmatpush2.bf16.msra.mxu0 %v183
  %256 = vmatprep.mubr.bf16.mxu0 %v201
  %257 = vmatmul.mubr.bf16.gmra.mxu0 %v103
  %v258 = vpop.f32.mrf.mxu0
  %v259 = vadd.f32 0.0, %v258
  %v260 = vpop.f32.mrf.mxu0
  %v261 = vpop.f32.mrf.mxu0
  %v262 = vadd.f32 0.0, %v261
  %v263 = vpop.f32.mrf.mxu0
  %264 = vmatprep.mubr.bf16.mxu0 %v204
  %265 = vmatmul.mubr.bf16.gmra.mxu0 %v105
  %v266 = vpop.f32.mrf.mxu0
  %v267 = vadd.f32 0.0, %v266
  %v268 = vpop.f32.mrf.mxu0
  %v269 = vpop.f32.mrf.mxu0
  %v270 = vadd.f32 0.0, %v269
  %v271 = vpop.f32.mrf.mxu0
  %272 = vmatprep.mubr.bf16.mxu0 %v207
  %273 = vmatmul.mubr.bf16.gmra.mxu0 %v107
  %v274 = vpop.f32.mrf.mxu0
  %v275 = vadd.f32 0.0, %v274
  %v276 = vpop.f32.mrf.mxu0
  %v277 = vpop.f32.mrf.mxu0
  %v278 = vadd.f32 0.0, %v277
  %v279 = vpop.f32.mrf.mxu0
  %280 = vmatprep.mubr.bf16.mxu0 %v210
  %281 = vmatmul.mubr.bf16.gmra.mxu0 %v109
  %v282 = vpop.f32.mrf.mxu0
  %v283 = vadd.f32 0.0, %v282
  %v284 = vpop.f32.mrf.mxu0
  %v285 = vpop.f32.mrf.mxu0
  %v286 = vadd.f32 0.0, %v285
  %v287 = vpop.f32.mrf.mxu0
  %288 = vmatprep.mubr.bf16.mxu0 %v213
  %289 = vmatmul.mubr.bf16.gmra.mxu0 %v111
  %v290 = vpop.f32.mrf.mxu0
  %v291 = vadd.f32 0.0, %v290
  %v292 = vpop.f32.mrf.mxu0
  %v293 = vpop.f32.mrf.mxu0
  %v294 = vadd.f32 0.0, %v293
  %v295 = vpop.f32.mrf.mxu0
  %296 = vmatprep.mubr.bf16.mxu0 %v216
  %297 = vmatmul.mubr.bf16.gmra.mxu0 %v113
  %v298 = vpop.f32.mrf.mxu0
  %v299 = vadd.f32 0.0, %v298
  %v300 = vpop.f32.mrf.mxu0
  %v301 = vpop.f32.mrf.mxu0
  %v302 = vadd.f32 0.0, %v301
  %v303 = vpop.f32.mrf.mxu0
  %304 = vmatprep.mubr.bf16.mxu0 %v219
  %305 = vmatmul.mubr.bf16.gmra.mxu0 %v115
  %v306 = vpop.f32.mrf.mxu0
  %v307 = vadd.f32 0.0, %v306
  %v308 = vpop.f32.mrf.mxu0
  %v309 = vpop.f32.mrf.mxu0
  %v310 = vadd.f32 0.0, %v309
  %v311 = vpop.f32.mrf.mxu0
  %312 = vmatprep.mubr.bf16.mxu0 %v222
  %313 = vmatmul.mubr.bf16.gmra.mxu0 %v117
  %v314 = vpop.f32.mrf.mxu0
  %v315 = vadd.f32 0.0, %v314
  %v316 = vpop.f32.mrf.mxu0
  %v317 = vpop.f32.mrf.mxu0
  %v318 = vadd.f32 0.0, %v317
  %v319 = vpop.f32.mrf.mxu0
  %320 = vdwg.mxu0
  %v321 = vmul.f32 %v259, %v259
  %v322 = vmul.f32 %v262, %v262
  %v323 = vmul.f32 %v267, %v267
  %v324 = vmul.f32 %v270, %v270
  %v325 = vmul.f32 %v275, %v275
  %v326 = vmul.f32 %v278, %v278
  %v327 = vmul.f32 %v283, %v283
  %v328 = vmul.f32 %v286, %v286
  %v329 = vmul.f32 %v291, %v291
  %v330 = vmul.f32 %v294, %v294
  %v331 = vmul.f32 %v299, %v299
  %v332 = vmul.f32 %v302, %v302
  %v333 = vmul.f32 %v307, %v307
  %v334 = vmul.f32 %v310, %v310
  %v335 = vmul.f32 %v315, %v315
  %v336 = vmul.f32 %v318, %v318
  %v337 = vsel %vm199, %v321, 0.0
  %338 = vadd.xlane.f32.xlu0 %v337
  %v339 = vpop.xlane.xlu0 %338
  %v340 = vsel %vm199, %v322, 0.0
  %341 = vadd.xlane.f32.xlu0 %v340
  %v342 = vpop.xlane.xlu0 %341
  %v343 = vsel %vm199, %v323, 0.0
  %344 = vadd.xlane.f32.xlu0 %v343
  %v345 = vpop.xlane.xlu0 %344
  %v346 = vsel %vm199, %v324, 0.0
  %347 = vadd.xlane.f32.xlu0 %v346
  %v348 = vpop.xlane.xlu0 %347
  %v349 = vsel %vm199, %v325, 0.0
  %350 = vadd.xlane.f32.xlu0 %v349
  %v351 = vpop.xlane.xlu0 %350
  %v352 = vsel %vm199, %v326, 0.0
  %353 = vadd.xlane.f32.xlu0 %v352
  %v354 = vpop.xlane.xlu0 %353
  %v355 = vsel %vm199, %v327, 0.0
  %356 = vadd.xlane.f32.xlu0 %v355
  %v357 = vpop.xlane.xlu0 %356
  %v358 = vsel %vm199, %v328, 0.0
  %359 = vadd.xlane.f32.xlu0 %v358
  %v360 = vpop.xlane.xlu0 %359
  %v361 = vsel %vm199, %v329, 0.0
  %362 = vadd.xlane.f32.xlu0 %v361
  %v363 = vpop.xlane.xlu0 %362
  %v364 = vsel %vm199, %v330, 0.0
  %365 = vadd.xlane.f32.xlu0 %v364
  %v366 = vpop.xlane.xlu0 %365
  %v367 = vsel %vm199, %v331, 0.0
  %368 = vadd.xlane.f32.xlu0 %v367
  %v369 = vpop.xlane.xlu0 %368
  %v370 = vsel %vm199, %v332, 0.0
  %371 = vadd.xlane.f32.xlu0 %v370
  %v372 = vpop.xlane.xlu0 %371
  %v373 = vsel %vm199, %v333, 0.0
  %374 = vadd.xlane.f32.xlu0 %v373
  %v375 = vpop.xlane.xlu0 %374
  %v376 = vsel %vm199, %v334, 0.0
  %377 = vadd.xlane.f32.xlu0 %v376
  %v378 = vpop.xlane.xlu0 %377
  %v379 = vsel %vm199, %v335, 0.0
  %380 = vadd.xlane.f32.xlu0 %v379
  %v381 = vpop.xlane.xlu0 %380
  %v382 = vsel %vm199, %v336, 0.0
  %383 = vadd.xlane.f32.xlu0 %v382
  %v384 = vpop.xlane.xlu0 %383
  %v385 = vrcp.pop 64.0
  %v386 = vmul.f32 %v339, %v385
  %v387 = vmul.f32 %v342, %v385
  %v388 = vmul.f32 %v345, %v385
  %v389 = vmul.f32 %v348, %v385
  %v390 = vmul.f32 %v351, %v385
  %v391 = vmul.f32 %v354, %v385
  %v392 = vmul.f32 %v357, %v385
  %v393 = vmul.f32 %v360, %v385
  %v394 = vmul.f32 %v363, %v385
  %v395 = vmul.f32 %v366, %v385
  %v396 = vmul.f32 %v369, %v385
  %v397 = vmul.f32 %v372, %v385
  %v398 = vmul.f32 %v375, %v385
  %v399 = vmul.f32 %v378, %v385
  %v400 = vmul.f32 %v381, %v385
  %v401 = vmul.f32 %v384, %v385
  %v402 = vadd.f32 %v386, 1e-05
  %v403 = vadd.f32 %v387, 1e-05
  %v404 = vadd.f32 %v388, 1e-05
  %v405 = vadd.f32 %v389, 1e-05
  %v406 = vadd.f32 %v390, 1e-05
  %v407 = vadd.f32 %v391, 1e-05
  %v408 = vadd.f32 %v392, 1e-05
  %v409 = vadd.f32 %v393, 1e-05
  %v410 = vadd.f32 %v394, 1e-05
  %v411 = vadd.f32 %v395, 1e-05
  %v412 = vadd.f32 %v396, 1e-05
  %v413 = vadd.f32 %v397, 1e-05
  %v414 = vadd.f32 %v398, 1e-05
  %v415 = vadd.f32 %v399, 1e-05
  %v416 = vadd.f32 %v400, 1e-05
  %v417 = vadd.f32 %v401, 1e-05
  %v418 = vrsqrt.pop %v402
  %v419 = vrsqrt.pop %v403
  %v420 = vrsqrt.pop %v404
  %v421 = vrsqrt.pop %v405
  %v422 = vrsqrt.pop %v406
  %v423 = vrsqrt.pop %v407
  %v424 = vrsqrt.pop %v408
  %v425 = vrsqrt.pop %v409
  %v426 = vrsqrt.pop %v410
  %v427 = vrsqrt.pop %v411
  %v428 = vrsqrt.pop %v412
  %v429 = vrsqrt.pop %v413
  %v430 = vrsqrt.pop %v414
  %v431 = vrsqrt.pop %v415
  %v432 = vrsqrt.pop %v416
  %v433 = vrsqrt.pop %v417
  %v434 = vmul.f32 %v259, %v418
  %v435 = vmul.f32 %v262, %v419
  %v436 = vmul.f32 %v267, %v420
  %v437 = vmul.f32 %v270, %v421
  %v438 = vmul.f32 %v275, %v422
  %v439 = vmul.f32 %v278, %v423
  %v440 = vmul.f32 %v283, %v424
  %v441 = vmul.f32 %v286, %v425
  %v442 = vmul.f32 %v291, %v426
  %v443 = vmul.f32 %v294, %v427
  %v444 = vmul.f32 %v299, %v428
  %v445 = vmul.f32 %v302, %v429
  %v446 = vmul.f32 %v307, %v430
  %v447 = vmul.f32 %v310, %v431
  %v448 = vmul.f32 %v315, %v432
  %v449 = vmul.f32 %v318, %v433
  %v450 = vld [vmem:[%s2] sm:$0x1]
  %v451 = vunpack.c.l.bf16 %v450
  %v452 = vlaneseq
  %v453 = vshrl.u32 %v452, 7
  %v454 = vsub.s32 0, %v453
  %v455 = vrot.slane %v451, %v454
  %v456 = vmul.f32 %v434, %v455
  %v457 = vmul.f32 %v435, %v455
  %v458 = vmul.f32 %v436, %v455
  %v459 = vmul.f32 %v437, %v455
  %v460 = vmul.f32 %v438, %v455
  %v461 = vmul.f32 %v439, %v455
  %v462 = vmul.f32 %v440, %v455
  %v463 = vmul.f32 %v441, %v455
  %v464 = vmul.f32 %v442, %v455
  %v465 = vmul.f32 %v443, %v455
  %v466 = vmul.f32 %v444, %v455
  %v467 = vmul.f32 %v445, %v455
  %v468 = vmul.f32 %v446, %v455
  %v469 = vmul.f32 %v447, %v455
  %v470 = vmul.f32 %v448, %v455
  %v471 = vmul.f32 %v449, %v455
  %v472 = vpack.c.bf16 %v457, %v456
  %v473 = vpack.c.bf16 %v459, %v458
  %v474 = vpack.c.bf16 %v461, %v460
  %v475 = vpack.c.bf16 %v463, %v462
  %v476 = vpack.c.bf16 %v465, %v464
  %v477 = vpack.c.bf16 %v467, %v466
  %v478 = vpack.c.bf16 %v469, %v468
  %v479 = vpack.c.bf16 %v471, %v470
  %v488 = vunpack.c.l.b16 %v472
  %v489 = vunpack.c.h.b16 %v472
  %v490 = vunpack.c.l.b16 %v473
  %v491 = vunpack.c.h.b16 %v473
  %v492 = vunpack.c.l.b16 %v474
  %v493 = vunpack.c.h.b16 %v474
  %v494 = vunpack.c.l.b16 %v475
  %v495 = vunpack.c.h.b16 %v475
  %v496 = vunpack.c.l.b16 %v476
  %v497 = vunpack.c.h.b16 %v476
  %v498 = vunpack.c.l.b16 %v477
  %v499 = vunpack.c.h.b16 %v477
  %v500 = vunpack.c.l.b16 %v478
  %v501 = vunpack.c.h.b16 %v478
  %v502 = vunpack.c.l.b16 %v479
  %v503 = vunpack.c.h.b16 %v479
  %v504 = vpack.c.b16 %v488, %v488
  %v505 = vpack.c.b16 %v489, %v489
  %v506 = vpack.c.b16 %v490, %v490
  %v507 = vpack.c.b16 %v491, %v491
  %v508 = vpack.c.b16 %v492, %v492
  %v509 = vpack.c.b16 %v493, %v493
  %v510 = vpack.c.b16 %v494, %v494
  %v511 = vpack.c.b16 %v495, %v495
  %v512 = vpack.c.b16 %v496, %v496
  %v513 = vpack.c.b16 %v497, %v497
  %v514 = vpack.c.b16 %v498, %v498
  %v515 = vpack.c.b16 %v499, %v499
  %v516 = vpack.c.b16 %v500, %v500
  %v517 = vpack.c.b16 %v501, %v501
  %v518 = vpack.c.b16 %v502, %v502
  %v519 = vpack.c.b16 %v503, %v503
  %vm536 = vcmask 519168
  %537 = vst.msk [vmem:[%s3] sm:$0xf] %vm536, %v504
  %538 = vst.msk [vmem:[%s3 + $0x4] sm:$0xf] %vm536, %v505
  %539 = vst.msk [vmem:[%s3 + $0x8] sm:$0xf] %vm536, %v506
  %540 = vst.msk [vmem:[%s3 + $0xc] sm:$0xf] %vm536, %v507
  %541 = vst.msk [vmem:[%s3 + $0x10] sm:$0xf] %vm536, %v508
  %542 = vst.msk [vmem:[%s3 + $0x14] sm:$0xf] %vm536, %v509
  %543 = vst.msk [vmem:[%s3 + $0x18] sm:$0xf] %vm536, %v510
  %544 = vst.msk [vmem:[%s3 + $0x1c] sm:$0xf] %vm536, %v511
  %545 = vst.msk [vmem:[%s3 + $0x20] sm:$0xf] %vm536, %v512
  %546 = vst.msk [vmem:[%s3 + $0x24] sm:$0xf] %vm536, %v513
  %547 = vst.msk [vmem:[%s3 + $0x28] sm:$0xf] %vm536, %v514
  %548 = vst.msk [vmem:[%s3 + $0x2c] sm:$0xf] %vm536, %v515
  %549 = vst.msk [vmem:[%s3 + $0x30] sm:$0xf] %vm536, %v516
  %550 = vst.msk [vmem:[%s3 + $0x34] sm:$0xf] %vm536, %v517
  %551 = vst.msk [vmem:[%s3 + $0x38] sm:$0xf] %vm536, %v518
  %552 = vst.msk [vmem:[%s3 + $0x3c] sm:$0xf] %vm536, %v519
  // Predicated region
  $region14: #{tpu_custom_call.1} parent=0 // pred_check
    _
  $region15: #{tpu_custom_call.1} parent=0 // pred_check_branch
    %554 = sbr.rel (0) target = $region17
  $region16: #{tpu_custom_call.1} parent=0 // pred_region
    _
  $region17: #{tpu_custom_call.1} parent=0 // pred_fallthru
    _
  // Predicated region
  $region18: #{tpu_custom_call.1} parent=0 // pred_check
    _
  $region19: #{tpu_custom_call.1} parent=0 // pred_check_branch
    %556 = sbr.rel (0) target = $region21
  $region20: #{tpu_custom_call.1} parent=0 // pred_region
    _
  $region21: #{tpu_custom_call.1} parent=0 // pred_fallthru
    _

</llo_original>
